<compile_context>
chip_gen: v7x
topology: tpu7x:2x2x1
jax: 0.10.0
libtpu: 0.0.40
codegen_flags: <defaults>
</compile_context>

<pallas_src>
import math

import jax
import jax.numpy as jnp
from jax import lax
from jax.experimental import pallas as pl
from jax.experimental.pallas import tpu as pltpu


def _mapping_kernel(x_ref, w_ref, b_ref, o_ref):
    """One grid step = one contiguous chunk of styles; styles and layers statically unrolled.

    x_ref : (S_blk, B, F)     input activations for this style chunk (f32)
    w_ref : (S_blk, L, F, F)  all L scaled weight matrices per style (weight_dtype)
    b_ref : (L, F)            all biases (f32, tiny, fully resident)
    o_ref : (S_blk, B, F)     output for this style chunk
    """
    s_blk = w_ref.shape[0]
    n_layers = w_ref.shape[1]

    for s in range(s_blk):                                 # static unroll over styles
        x = x_ref[s].astype(jnp.float32)                   # (B, F) f32 activations
        for l in range(n_layers):                          # static unroll over layers
            w = w_ref[s, l]                                # (F_out, F_in)
            # x @ w.T : contract last dim of x with last dim of w (matches F.linear).
            # Narrow-dtype operands, f32 accumulation on the MXU.
            y = lax.dot_general(x.astype(w.dtype), w,
                                (((1,), (1,)), ((), ())),
                                preferred_element_type=jnp.float32)
            y = y + b_ref[l][None, :]                      # per-layer bias in f32
            x = jnp.maximum(y, 0.2 * y)                    # LeakyReLU(0.2)
        o_ref[s] = x.astype(o_ref.dtype)


def prepare_params(weights, biases, *, weight_dtype=jnp.bfloat16):
    """One-time parameter prep (call at init, NOT per forward).

    weights: (L, S, F, F) f32, ALREADY scaled by 1/sqrt(in_features) (EqualizedWeight).
    biases : (L, F) f32.
    Returns (w_slff, b_lf):
      w_slff: (S, L, F, F) in weight_dtype  -- contiguous per-style weight slabs.
      b_lf  : (L, F) f32.
    Scale is baked in before any narrowing cast so bf16 quantization hits the final values.
    """
    w_slff = jnp.transpose(weights, (1, 0, 2, 3)).astype(weight_dtype)
    b_lf = biases.astype(jnp.float32)
    return w_slff, b_lf


def mapping_network_c2s(c, w_slff, b_lf):
    """Forward pass.

    c      : (B, S, F) activations.
    w_slff : (S, L, F, F) prepped weights from prepare_params (bf16 or f32).
    b_lf   : (L, F) f32 biases.
    Returns (B, S, F) in c.dtype.
    """
    B, S, F = c.shape
    L = w_slff.shape[1]

    # Two grid steps when S is even: on v7x the "parallel" axis splits the styles across
    # both TensorCores; on v5e/v6e (single TC) the extra step costs ~0.35 us, negligible.
    G = 2 if (S % 2 == 0 and S >= 2) else 1
    S_blk = S // G

    x_sbf = jnp.transpose(c, (1, 0, 2))                    # (S, B, F) -- tiny activation transpose

    out = pl.pallas_call(
        _mapping_kernel,
        out_shape=jax.ShapeDtypeStruct((S, B, F), c.dtype),
        grid_spec=pltpu.PrefetchScalarGridSpec(
            num_scalar_prefetch=0,
            grid=(G,),
            in_specs=[
                pl.BlockSpec((S_blk, B, F), lambda i: (i, 0, 0)),        # activations chunk
                pl.BlockSpec((S_blk, L, F, F), lambda i: (i, 0, 0, 0)),  # weight slab chunk
                pl.BlockSpec((L, F), lambda i: (0, 0)),                  # biases (resident)
            ],
            out_specs=pl.BlockSpec((S_blk, B, F), lambda i: (i, 0, 0)),
        ),
        compiler_params=pltpu.CompilerParams(
            dimension_semantics=("parallel",)),            # megacore split on v7x
    )(x_sbf, w_slff, b_lf)

    return jnp.transpose(out, (1, 0, 2))                   # back to (B, S, F)


def reference(c, weights, biases):
    """Pure-JAX f32 reference mirroring the PyTorch forward.
    weights: (L, S, F, F), pre-scaled."""
    x = c
    L = weights.shape[0]
    for l in range(L):
        y = jnp.einsum('bsf,sgf->bsg', x, weights[l]) + biases[l][None, None, :]
        x = jnp.where(y >= 0, y, 0.2 * y)
    return x


if __name__ == "__main__":
    # Small shapes consistent with the module (per-style weight stacks).
    batch, style_dim, features, n_layers = 2, 6, 128, 3

    key = jax.random.PRNGKey(0)
    k_c, k_w = jax.random.split(key)

    c = jax.random.normal(k_c, (batch, style_dim, features), dtype=jnp.float32)

    # EqualizedWeight: randn * 0.01, scaled at forward time by 1/sqrt(in_features).
    raw_w = jax.random.normal(
        k_w, (n_layers, style_dim, features, features), dtype=jnp.float32) * 0.01
    scale = 1.0 / math.sqrt(features)
    weights = raw_w * scale                                 # scale applied BEFORE any cast
    biases = jnp.zeros((n_layers, features), dtype=jnp.float32)  # EqualizedLinear bias=0.0

    # ---- one-time parameter prep (hoisted out of the forward path) ----
    w_bf16, b_prep = prepare_params(weights, biases, weight_dtype=jnp.bfloat16)
    w_f32, _ = prepare_params(weights, biases, weight_dtype=jnp.float32)
    (w_bf16, w_f32, b_prep) = jax.block_until_ready((w_bf16, w_f32, b_prep))

    # ---- default bf16-weight path ----
    out = jax.block_until_ready(mapping_network_c2s(c, w_bf16, b_prep))

    # ---- f32 fallback path (exact original-module precision semantics) ----
    out_f32 = jax.block_until_ready(mapping_network_c2s(c, w_f32, b_prep))

    # References: true f32 semantics, and bf16-quantized-weight semantics for the bf16 path.
    ref = reference(c, weights, biases)
    w_q = weights.astype(jnp.bfloat16).astype(jnp.float32)
    ref_q = reference(c, w_q, biases)

    assert out.shape == (batch, style_dim, features)
    assert jnp.allclose(out_f32, ref, atol=1e-6, rtol=1e-2), "f32 kernel / f32 reference mismatch"
    assert jnp.allclose(out, ref_q, atol=1e-3, rtol=1e-2), "bf16 kernel / reference mismatch"

    print("KERNEL_OK")
</pallas_src>

<mosaic_0001>
module attributes {stable_mosaic.version = 11 : i64} {
  func.func @_mapping_kernel(%arg0: i32, %arg1: memref<3x2x128xf32, #tpu.memory_space<vmem>>, %arg2: memref<3x3x128x128xbf16, #tpu.memory_space<vmem>>, %arg3: memref<3x128xf32, #tpu.memory_space<vmem>>, %arg4: memref<3x2x128xf32, #tpu.memory_space<vmem>>) attributes {dimension_semantics = [#tpu.dimension_semantics<parallel>], iteration_bounds = array<i64: 2>, scalar_prefetch = 0 : i64, scratch_operands = 0 : i64, tpu.core_type = #tpu.core_type<tc>, window_params = [{transform_indices = @transform_0, window_bounds = array<i64: 3, 2, 128>}, {transform_indices = @transform_1, window_bounds = array<i64: 3, 3, 128, 128>}, {pipeline_mode = #tpu.pipeline_mode<synchronous>, transform_indices = @transform_2, window_bounds = array<i64: 3, 128>}, {transform_indices = @transform_3, window_bounds = array<i64: 3, 2, 128>}]} {
    %c0 = arith.constant 0 : index
    %c0_0 = arith.constant 0 : index
    %c0_1 = arith.constant 0 : index
    %0 = vector.load %arg1[%c0, %c0_0, %c0_1] : memref<3x2x128xf32, #tpu.memory_space<vmem>>, vector<1x2x128xf32>
    %1 = vector.shape_cast %0 : vector<1x2x128xf32> to vector<2x128xf32>
    %c0_2 = arith.constant 0 : index
    %c0_3 = arith.constant 0 : index
    %c0_4 = arith.constant 0 : index
    %c0_5 = arith.constant 0 : index
    %2 = vector.load %arg2[%c0_2, %c0_3, %c0_4, %c0_5] : memref<3x3x128x128xbf16, #tpu.memory_space<vmem>>, vector<1x1x128x128xbf16>
    %3 = vector.shape_cast %2 : vector<1x1x128x128xbf16> to vector<128x128xbf16>
    %4 = arith.truncf %1 : vector<2x128xf32> to vector<2x128xbf16>
    %cst = arith.constant dense<0.000000e+00> : vector<2x128xf32>
    %5 = tpu.matmul %4, %3, %cst {dimension_numbers = #tpu.dot_dimension_numbers<[1], [1], [0], [0], [0, 0, 1, 0], [], []>} : vector<2x128xbf16>, vector<128x128xbf16>, vector<2x128xf32> -> vector<2x128xf32>
    %c0_6 = arith.constant 0 : index
    %c0_7 = arith.constant 0 : index
    %6 = vector.load %arg3[%c0_6, %c0_7] : memref<3x128xf32, #tpu.memory_space<vmem>>, vector<1x128xf32>
    %7 = vector.shape_cast %6 : vector<1x128xf32> to vector<128xf32>
    %8 = vector.shape_cast %7 : vector<128xf32> to vector<1x128xf32>
    %9 = vector.broadcast %8 : vector<1x128xf32> to vector<2x128xf32>
    %10 = arith.addf %5, %9 : vector<2x128xf32>
    %cst_8 = arith.constant 2.000000e-01 : f32
    %11 = vector.broadcast %cst_8 : f32 to vector<2x128xf32>
    %12 = arith.mulf %11, %10 : vector<2x128xf32>
    %13 = arith.maximumf %10, %12 : vector<2x128xf32>
    %c0_9 = arith.constant 0 : index
    %c1 = arith.constant 1 : index
    %c0_10 = arith.constant 0 : index
    %c0_11 = arith.constant 0 : index
    %14 = vector.load %arg2[%c0_9, %c1, %c0_10, %c0_11] : memref<3x3x128x128xbf16, #tpu.memory_space<vmem>>, vector<1x1x128x128xbf16>
    %15 = vector.shape_cast %14 : vector<1x1x128x128xbf16> to vector<128x128xbf16>
    %16 = arith.truncf %13 : vector<2x128xf32> to vector<2x128xbf16>
    %cst_12 = arith.constant dense<0.000000e+00> : vector<2x128xf32>
    %17 = tpu.matmul %16, %15, %cst_12 {dimension_numbers = #tpu.dot_dimension_numbers<[1], [1], [0], [0], [0, 0, 1, 0], [], []>} : vector<2x128xbf16>, vector<128x128xbf16>, vector<2x128xf32> -> vector<2x128xf32>
    %c1_13 = arith.constant 1 : index
    %c0_14 = arith.constant 0 : index
    %18 = vector.load %arg3[%c1_13, %c0_14] : memref<3x128xf32, #tpu.memory_space<vmem>>, vector<1x128xf32>
    %19 = vector.shape_cast %18 : vector<1x128xf32> to vector<128xf32>
    %20 = vector.shape_cast %19 : vector<128xf32> to vector<1x128xf32>
    %21 = vector.broadcast %20 : vector<1x128xf32> to vector<2x128xf32>
    %22 = arith.addf %17, %21 : vector<2x128xf32>
    %cst_15 = arith.constant 2.000000e-01 : f32
    %23 = vector.broadcast %cst_15 : f32 to vector<2x128xf32>
    %24 = arith.mulf %23, %22 : vector<2x128xf32>
    %25 = arith.maximumf %22, %24 : vector<2x128xf32>
    %c0_16 = arith.constant 0 : index
    %c2 = arith.constant 2 : index
    %c0_17 = arith.constant 0 : index
    %c0_18 = arith.constant 0 : index
    %26 = vector.load %arg2[%c0_16, %c2, %c0_17, %c0_18] : memref<3x3x128x128xbf16, #tpu.memory_space<vmem>>, vector<1x1x128x128xbf16>
    %27 = vector.shape_cast %26 : vector<1x1x128x128xbf16> to vector<128x128xbf16>
    %28 = arith.truncf %25 : vector<2x128xf32> to vector<2x128xbf16>
    %cst_19 = arith.constant dense<0.000000e+00> : vector<2x128xf32>
    %29 = tpu.matmul %28, %27, %cst_19 {dimension_numbers = #tpu.dot_dimension_numbers<[1], [1], [0], [0], [0, 0, 1, 0], [], []>} : vector<2x128xbf16>, vector<128x128xbf16>, vector<2x128xf32> -> vector<2x128xf32>
    %c2_20 = arith.constant 2 : index
    %c0_21 = arith.constant 0 : index
    %30 = vector.load %arg3[%c2_20, %c0_21] : memref<3x128xf32, #tpu.memory_space<vmem>>, vector<1x128xf32>
    %31 = vector.shape_cast %30 : vector<1x128xf32> to vector<128xf32>
    %32 = vector.shape_cast %31 : vector<128xf32> to vector<1x128xf32>
    %33 = vector.broadcast %32 : vector<1x128xf32> to vector<2x128xf32>
    %34 = arith.addf %29, %33 : vector<2x128xf32>
    %cst_22 = arith.constant 2.000000e-01 : f32
    %35 = vector.broadcast %cst_22 : f32 to vector<2x128xf32>
    %36 = arith.mulf %35, %34 : vector<2x128xf32>
    %37 = arith.maximumf %34, %36 : vector<2x128xf32>
    %c0_23 = arith.constant 0 : index
    %c0_24 = arith.constant 0 : index
    %c0_25 = arith.constant 0 : index
    %38 = vector.load %arg4[%c0_23, %c0_24, %c0_25] : memref<3x2x128xf32, #tpu.memory_space<vmem>>, vector<1x2x128xf32>
    %39 = vector.shape_cast %38 : vector<1x2x128xf32> to vector<2x128xf32>
    %40 = vector.shape_cast %37 : vector<2x128xf32> to vector<1x2x128xf32>
    tpu.vector_store %arg4[%c0_23, %c0_24, %c0_25], %40 {strides = array<i32>} : memref<3x2x128xf32, #tpu.memory_space<vmem>>, vector<1x2x128xf32>,
    %c1_26 = arith.constant 1 : index
    %c0_27 = arith.constant 0 : index
    %c0_28 = arith.constant 0 : index
    %41 = vector.load %arg1[%c1_26, %c0_27, %c0_28] : memref<3x2x128xf32, #tpu.memory_space<vmem>>, vector<1x2x128xf32>
    %42 = vector.shape_cast %41 : vector<1x2x128xf32> to vector<2x128xf32>
    %c1_29 = arith.constant 1 : index
    %c0_30 = arith.constant 0 : index
    %c0_31 = arith.constant 0 : index
    %c0_32 = arith.constant 0 : index
    %43 = vector.load %arg2[%c1_29, %c0_30, %c0_31, %c0_32] : memref<3x3x128x128xbf16, #tpu.memory_space<vmem>>, vector<1x1x128x128xbf16>
    %44 = vector.shape_cast %43 : vector<1x1x128x128xbf16> to vector<128x128xbf16>
    %45 = arith.truncf %42 : vector<2x128xf32> to vector<2x128xbf16>
    %cst_33 = arith.constant dense<0.000000e+00> : vector<2x128xf32>
    %46 = tpu.matmul %45, %44, %cst_33 {dimension_numbers = #tpu.dot_dimension_numbers<[1], [1], [0], [0], [0, 0, 1, 0], [], []>} : vector<2x128xbf16>, vector<128x128xbf16>, vector<2x128xf32> -> vector<2x128xf32>
    %c0_34 = arith.constant 0 : index
    %c0_35 = arith.constant 0 : index
    %47 = vector.load %arg3[%c0_34, %c0_35] : memref<3x128xf32, #tpu.memory_space<vmem>>, vector<1x128xf32>
    %48 = vector.shape_cast %47 : vector<1x128xf32> to vector<128xf32>
    %49 = vector.shape_cast %48 : vector<128xf32> to vector<1x128xf32>
    %50 = vector.broadcast %49 : vector<1x128xf32> to vector<2x128xf32>
    %51 = arith.addf %46, %50 : vector<2x128xf32>
    %cst_36 = arith.constant 2.000000e-01 : f32
    %52 = vector.broadcast %cst_36 : f32 to vector<2x128xf32>
    %53 = arith.mulf %52, %51 : vector<2x128xf32>
    %54 = arith.maximumf %51, %53 : vector<2x128xf32>
    %c1_37 = arith.constant 1 : index
    %c1_38 = arith.constant 1 : index
    %c0_39 = arith.constant 0 : index
    %c0_40 = arith.constant 0 : index
    %55 = vector.load %arg2[%c1_37, %c1_38, %c0_39, %c0_40] : memref<3x3x128x128xbf16, #tpu.memory_space<vmem>>, vector<1x1x128x128xbf16>
    %56 = vector.shape_cast %55 : vector<1x1x128x128xbf16> to vector<128x128xbf16>
    %57 = arith.truncf %54 : vector<2x128xf32> to vector<2x128xbf16>
    %cst_41 = arith.constant dense<0.000000e+00> : vector<2x128xf32>
    %58 = tpu.matmul %57, %56, %cst_41 {dimension_numbers = #tpu.dot_dimension_numbers<[1], [1], [0], [0], [0, 0, 1, 0], [], []>} : vector<2x128xbf16>, vector<128x128xbf16>, vector<2x128xf32> -> vector<2x128xf32>
    %c1_42 = arith.constant 1 : index
    %c0_43 = arith.constant 0 : index
    %59 = vector.load %arg3[%c1_42, %c0_43] : memref<3x128xf32, #tpu.memory_space<vmem>>, vector<1x128xf32>
    %60 = vector.shape_cast %59 : vector<1x128xf32> to vector<128xf32>
    %61 = vector.shape_cast %60 : vector<128xf32> to vector<1x128xf32>
    %62 = vector.broadcast %61 : vector<1x128xf32> to vector<2x128xf32>
    %63 = arith.addf %58, %62 : vector<2x128xf32>
    %cst_44 = arith.constant 2.000000e-01 : f32
    %64 = vector.broadcast %cst_44 : f32 to vector<2x128xf32>
    %65 = arith.mulf %64, %63 : vector<2x128xf32>
    %66 = arith.maximumf %63, %65 : vector<2x128xf32>
    %c1_45 = arith.constant 1 : index
    %c2_46 = arith.constant 2 : index
    %c0_47 = arith.constant 0 : index
    %c0_48 = arith.constant 0 : index
    %67 = vector.load %arg2[%c1_45, %c2_46, %c0_47, %c0_48] : memref<3x3x128x128xbf16, #tpu.memory_space<vmem>>, vector<1x1x128x128xbf16>
    %68 = vector.shape_cast %67 : vector<1x1x128x128xbf16> to vector<128x128xbf16>
    %69 = arith.truncf %66 : vector<2x128xf32> to vector<2x128xbf16>
    %cst_49 = arith.constant dense<0.000000e+00> : vector<2x128xf32>
    %70 = tpu.matmul %69, %68, %cst_49 {dimension_numbers = #tpu.dot_dimension_numbers<[1], [1], [0], [0], [0, 0, 1, 0], [], []>} : vector<2x128xbf16>, vector<128x128xbf16>, vector<2x128xf32> -> vector<2x128xf32>
    %c2_50 = arith.constant 2 : index
    %c0_51 = arith.constant 0 : index
    %71 = vector.load %arg3[%c2_50, %c0_51] : memref<3x128xf32, #tpu.memory_space<vmem>>, vector<1x128xf32>
    %72 = vector.shape_cast %71 : vector<1x128xf32> to vector<128xf32>
    %73 = vector.shape_cast %72 : vector<128xf32> to vector<1x128xf32>
    %74 = vector.broadcast %73 : vector<1x128xf32> to vector<2x128xf32>
    %75 = arith.addf %70, %74 : vector<2x128xf32>
    %cst_52 = arith.constant 2.000000e-01 : f32
    %76 = vector.broadcast %cst_52 : f32 to vector<2x128xf32>
    %77 = arith.mulf %76, %75 : vector<2x128xf32>
    %78 = arith.maximumf %75, %77 : vector<2x128xf32>
    %c1_53 = arith.constant 1 : index
    %c0_54 = arith.constant 0 : index
    %c0_55 = arith.constant 0 : index
    %79 = vector.load %arg4[%c1_53, %c0_54, %c0_55] : memref<3x2x128xf32, #tpu.memory_space<vmem>>, vector<1x2x128xf32>
    %80 = vector.shape_cast %79 : vector<1x2x128xf32> to vector<2x128xf32>
    %81 = vector.shape_cast %78 : vector<2x128xf32> to vector<1x2x128xf32>
    tpu.vector_store %arg4[%c1_53, %c0_54, %c0_55], %81 {strides = array<i32>} : memref<3x2x128xf32, #tpu.memory_space<vmem>>, vector<1x2x128xf32>,
    %c2_56 = arith.constant 2 : index
    %c0_57 = arith.constant 0 : index
    %c0_58 = arith.constant 0 : index
    %82 = vector.load %arg1[%c2_56, %c0_57, %c0_58] : memref<3x2x128xf32, #tpu.memory_space<vmem>>, vector<1x2x128xf32>
    %83 = vector.shape_cast %82 : vector<1x2x128xf32> to vector<2x128xf32>
    %c2_59 = arith.constant 2 : index
    %c0_60 = arith.constant 0 : index
    %c0_61 = arith.constant 0 : index
    %c0_62 = arith.constant 0 : index
    %84 = vector.load %arg2[%c2_59, %c0_60, %c0_61, %c0_62] : memref<3x3x128x128xbf16, #tpu.memory_space<vmem>>, vector<1x1x128x128xbf16>
    %85 = vector.shape_cast %84 : vector<1x1x128x128xbf16> to vector<128x128xbf16>
    %86 = arith.truncf %83 : vector<2x128xf32> to vector<2x128xbf16>
    %cst_63 = arith.constant dense<0.000000e+00> : vector<2x128xf32>
    %87 = tpu.matmul %86, %85, %cst_63 {dimension_numbers = #tpu.dot_dimension_numbers<[1], [1], [0], [0], [0, 0, 1, 0], [], []>} : vector<2x128xbf16>, vector<128x128xbf16>, vector<2x128xf32> -> vector<2x128xf32>
    %c0_64 = arith.constant 0 : index
    %c0_65 = arith.constant 0 : index
    %88 = vector.load %arg3[%c0_64, %c0_65] : memref<3x128xf32, #tpu.memory_space<vmem>>, vector<1x128xf32>
    %89 = vector.shape_cast %88 : vector<1x128xf32> to vector<128xf32>
    %90 = vector.shape_cast %89 : vector<128xf32> to vector<1x128xf32>
    %91 = vector.broadcast %90 : vector<1x128xf32> to vector<2x128xf32>
    %92 = arith.addf %87, %91 : vector<2x128xf32>
    %cst_66 = arith.constant 2.000000e-01 : f32
    %93 = vector.broadcast %cst_66 : f32 to vector<2x128xf32>
    %94 = arith.mulf %93, %92 : vector<2x128xf32>
    %95 = arith.maximumf %92, %94 : vector<2x128xf32>
    %c2_67 = arith.constant 2 : index
    %c1_68 = arith.constant 1 : index
    %c0_69 = arith.constant 0 : index
    %c0_70 = arith.constant 0 : index
    %96 = vector.load %arg2[%c2_67, %c1_68, %c0_69, %c0_70] : memref<3x3x128x128xbf16, #tpu.memory_space<vmem>>, vector<1x1x128x128xbf16>
    %97 = vector.shape_cast %96 : vector<1x1x128x128xbf16> to vector<128x128xbf16>
    %98 = arith.truncf %95 : vector<2x128xf32> to vector<2x128xbf16>
    %cst_71 = arith.constant dense<0.000000e+00> : vector<2x128xf32>
    %99 = tpu.matmul %98, %97, %cst_71 {dimension_numbers = #tpu.dot_dimension_numbers<[1], [1], [0], [0], [0, 0, 1, 0], [], []>} : vector<2x128xbf16>, vector<128x128xbf16>, vector<2x128xf32> -> vector<2x128xf32>
    %c1_72 = arith.constant 1 : index
    %c0_73 = arith.constant 0 : index
    %100 = vector.load %arg3[%c1_72, %c0_73] : memref<3x128xf32, #tpu.memory_space<vmem>>, vector<1x128xf32>
    %101 = vector.shape_cast %100 : vector<1x128xf32> to vector<128xf32>
    %102 = vector.shape_cast %101 : vector<128xf32> to vector<1x128xf32>
    %103 = vector.broadcast %102 : vector<1x128xf32> to vector<2x128xf32>
    %104 = arith.addf %99, %103 : vector<2x128xf32>
    %cst_74 = arith.constant 2.000000e-01 : f32
    %105 = vector.broadcast %cst_74 : f32 to vector<2x128xf32>
    %106 = arith.mulf %105, %104 : vector<2x128xf32>
    %107 = arith.maximumf %104, %106 : vector<2x128xf32>
    %c2_75 = arith.constant 2 : index
    %c2_76 = arith.constant 2 : index
    %c0_77 = arith.constant 0 : index
    %c0_78 = arith.constant 0 : index
    %108 = vector.load %arg2[%c2_75, %c2_76, %c0_77, %c0_78] : memref<3x3x128x128xbf16, #tpu.memory_space<vmem>>, vector<1x1x128x128xbf16>
    %109 = vector.shape_cast %108 : vector<1x1x128x128xbf16> to vector<128x128xbf16>
    %110 = arith.truncf %107 : vector<2x128xf32> to vector<2x128xbf16>
    %cst_79 = arith.constant dense<0.000000e+00> : vector<2x128xf32>
    %111 = tpu.matmul %110, %109, %cst_79 {dimension_numbers = #tpu.dot_dimension_numbers<[1], [1], [0], [0], [0, 0, 1, 0], [], []>} : vector<2x128xbf16>, vector<128x128xbf16>, vector<2x128xf32> -> vector<2x128xf32>
    %c2_80 = arith.constant 2 : index
    %c0_81 = arith.constant 0 : index
    %112 = vector.load %arg3[%c2_80, %c0_81] : memref<3x128xf32, #tpu.memory_space<vmem>>, vector<1x128xf32>
    %113 = vector.shape_cast %112 : vector<1x128xf32> to vector<128xf32>
    %114 = vector.shape_cast %113 : vector<128xf32> to vector<1x128xf32>
    %115 = vector.broadcast %114 : vector<1x128xf32> to vector<2x128xf32>
    %116 = arith.addf %111, %115 : vector<2x128xf32>
    %cst_82 = arith.constant 2.000000e-01 : f32
    %117 = vector.broadcast %cst_82 : f32 to vector<2x128xf32>
    %118 = arith.mulf %117, %116 : vector<2x128xf32>
    %119 = arith.maximumf %116, %118 : vector<2x128xf32>
    %c2_83 = arith.constant 2 : index
    %c0_84 = arith.constant 0 : index
    %c0_85 = arith.constant 0 : index
    %120 = vector.load %arg4[%c2_83, %c0_84, %c0_85] : memref<3x2x128xf32, #tpu.memory_space<vmem>>, vector<1x2x128xf32>
    %121 = vector.shape_cast %120 : vector<1x2x128xf32> to vector<2x128xf32>
    %122 = vector.shape_cast %119 : vector<2x128xf32> to vector<1x2x128xf32>
    tpu.vector_store %arg4[%c2_83, %c0_84, %c0_85], %122 {strides = array<i32>} : memref<3x2x128xf32, #tpu.memory_space<vmem>>, vector<1x2x128xf32>,
    return
  }
  func.func @transform_0(%arg0: i32) -> (i32, i32, i32) {
    %c0_i32 = arith.constant 0 : i32
    %c0_i32_0 = arith.constant 0 : i32
    %c0_i32_1 = arith.constant 0 : i32
    return %arg0, %c0_i32, %c0_i32_0 : i32, i32, i32
  }
  func.func @transform_1(%arg0: i32) -> (i32, i32, i32, i32) {
    %c0_i32 = arith.constant 0 : i32
    %c0_i32_0 = arith.constant 0 : i32
    %c0_i32_1 = arith.constant 0 : i32
    %c0_i32_2 = arith.constant 0 : i32
    return %arg0, %c0_i32, %c0_i32_0, %c0_i32_1 : i32, i32, i32, i32
  }
  func.func @transform_2(%arg0: i32) -> (i32, i32) {
    %c0_i32 = arith.constant 0 : i32
    %c0_i32_0 = arith.constant 0 : i32
    %c0_i32_1 = arith.constant 0 : i32
    return %c0_i32, %c0_i32_0 : i32, i32
  }
  func.func @transform_3(%arg0: i32) -> (i32, i32, i32) {
    %c0_i32 = arith.constant 0 : i32
    %c0_i32_0 = arith.constant 0 : i32
    %c0_i32_1 = arith.constant 0 : i32
    return %arg0, %c0_i32, %c0_i32_0 : i32, i32, i32
  }
}

</mosaic_0001>

<llo_original>
// kernel: tpu_custom_call.1
$region0: #{tpu_custom_call.1}
  #allocation0 [shape = 'u32[]', space=smem, size = 0x4, offset = 0x4, fixed_abs, tag = 'smem constant byte address 0x4 - core index']
  #allocation1 [shape = 'u32[144,128]{1,0:T(1,128)}', space=vmem, size = 0x12000, scoped, tag = 'internal scratch']
  %s0 = inlined_call_operand.hbm [shape: f32[6,2,128], index: 0, kind: input, shape index: {}]
  %s1 = inlined_call_operand.hbm [shape: bf16[6,3,128,128], index: 1, kind: input, shape index: {}]
  %s2 = inlined_call_operand.vmem [shape: f32[3,128], index: 2, kind: input, shape index: {}]
  %s3 = inlined_call_operand.hbm [shape: f32[6,2,128], index: 3, kind: output, shape index: {}]
  %s4 = sld [smem:[#allocation0]]
  $region53: #{tpu_custom_call.1} parent=0
    _
  %s6 = ssub.s32 1, %s4
  %s7 = scalar_select 0, %s6, %s4
  $region1: #{tpu_custom_call.1} parent=0
    #allocation2 [shape = 'u8[6144]{0}', space=vmem, size = 0x1800, scoped, tag = 'input window, operand 0']
    #allocation3 [shape = 's32[2]{0}', space=sflag, size = 0x8, scoped, tag = 'scoped memory for tpu_custom_call.1']
    #allocation4 [shape = 's32[2]{0}', space=sflag, size = 0x8, scoped, tag = 'scoped memory for tpu_custom_call.1']
    #allocation5 [shape = 'u8[589824]{0}', space=vmem, size = 0x90000, scoped, tag = 'input window, operand 1']
    #allocation6 [shape = 's32[2]{0}', space=sflag, size = 0x8, scoped, tag = 'scoped memory for tpu_custom_call.1']
    #allocation7 [shape = 'u8[6144]{0}', space=vmem, size = 0x1800, scoped, tag = 'output window, operand 0']
    %8 = vsyncpa [#allocation3], 0
    %s9 = scalar_lea.sflag [#allocation3], 1
    %10 = vsyncpa %s9, 0
    %11 = vsyncpa [#allocation6], 0
    %s12 = scalar_lea.sflag [#allocation6], 1
    %13 = vsyncpa %s12, 0
    %14 = vsyncpa [#allocation4], 0
    %s15 = scalar_lea.sflag [#allocation4], 1
    %16 = vsyncpa %s15, 0
    loop: start=0, step=1, limit=4
    $region2: #{tpu_custom_call.1} parent=1 // loop_pre_header
      _
    $region3: #{tpu_custom_call.1} parent=1 // loop_header
      %s18 = sphi 0, %s22
      %p19 = scmp.ge.s32.totalorder %s18, 4
      %s28 = sphi 0, %s30
      %s31 = sphi 0, %s28
      %s32 = sphi 0, %s31
      %s48 = sphi 0, %s32
      %s54 = sphi 0, %s56
      %s57 = sphi 0, %s54
      %s58 = sphi 0, %s57
      %s74 = sphi 0, %s58
      %s78 = sphi 0, %s78
      %s80 = sphi 0, %s78
      %s81 = sphi 0, %s80
      %s95 = sphi 0, %s81
      %s101 = sphi 0, %s103
      %s104 = sphi 0, %s101
      %s105 = sphi 0, %s104
      %s121 = sphi 0, %s105
    $region4: #{tpu_custom_call.1} parent=1 // loop_header_branch
      %21 = sbr.rel (%p19) target = $region8
    $region5: #{tpu_custom_call.1} parent=1 // loop_body
      %s23 = ssub.s32 %s18, 1
      %s24 = ssub.s32 %s18, 2
      %s25 = sadd.s32 %s18, 1
      %s26 = ssub.s32 %s18, %s25
      %p27 = scmp.eq.s32.totalorder %s26, 0
      %s29 = sadd.s32 %s28, 1
      %s30 = scalar_select %p27, %s28, %s29
      %p33 = pneg %p27
      %p34 = scmp.eq.s32.totalorder %s18, 1
      %p35 = por %p33, %p34
      %p36 = scmp.ne.s32.totalorder %s28, %s31
      %p37 = scmp.eq.s32.totalorder %s18, 0
      %p38 = por %p36, %p37
      %p39 = scmp.ne.s32.totalorder %s28, %s31
      %p40 = scmp.eq.s32.totalorder %s23, 1
      %p41 = por %p39, %p40
      %p42 = scmp.ne.s32.totalorder %s31, %s32
      %p43 = scmp.eq.s32.totalorder %s23, 0
      %p44 = por %p42, %p43
      %p45 = scmp.ne.s32.totalorder %s31, %s32
      %p46 = scmp.eq.s32.totalorder %s24, 1
      %p47 = por %p45, %p46
      %p49 = scmp.ne.s32.totalorder %s32, %s48
      %p50 = scmp.eq.s32.totalorder %s24, 0
      %p51 = por %p49, %p50
      %s52 = ssub.s32 %s18, %s25
      %p53 = scmp.eq.s32.totalorder %s52, 0
      %s55 = sadd.s32 %s54, 1
      %s56 = scalar_select %p53, %s54, %s55
      %p59 = pneg %p53
      %p60 = scmp.eq.s32.totalorder %s18, 1
      %p61 = por %p59, %p60
      %p62 = scmp.ne.s32.totalorder %s54, %s57
      %p63 = scmp.eq.s32.totalorder %s18, 0
      %p64 = por %p62, %p63
      %p65 = scmp.ne.s32.totalorder %s54, %s57
      %p66 = scmp.eq.s32.totalorder %s23, 1
      %p67 = por %p65, %p66
      %p68 = scmp.ne.s32.totalorder %s57, %s58
      %p69 = scmp.eq.s32.totalorder %s23, 0
      %p70 = por %p68, %p69
      %p71 = scmp.ne.s32.totalorder %s57, %s58
      %p72 = scmp.eq.s32.totalorder %s24, 1
      %p73 = por %p71, %p72
      %p75 = scmp.ne.s32.totalorder %s58, %s74
      %p76 = scmp.eq.s32.totalorder %s24, 0
      %p77 = por %p75, %p76
      %s79 = sadd.s32 %s78, 1
      %p82 = scmp.eq.s32.totalorder %s18, 1
      %p83 = scmp.ne.s32.totalorder %s78, %s80
      %p84 = scmp.eq.s32.totalorder %s18, 0
      %p85 = por %p83, %p84
      %p86 = scmp.ne.s32.totalorder %s78, %s80
      %p87 = scmp.eq.s32.totalorder %s23, 1
      %p88 = por %p86, %p87
      %p89 = scmp.ne.s32.totalorder %s80, %s81
      %p90 = scmp.eq.s32.totalorder %s23, 0
      %p91 = por %p89, %p90
      %p92 = scmp.ne.s32.totalorder %s80, %s81
      %p93 = scmp.eq.s32.totalorder %s24, 1
      %p94 = por %p92, %p93
      %p96 = scmp.ne.s32.totalorder %s81, %s95
      %p97 = scmp.eq.s32.totalorder %s24, 0
      %p98 = por %p96, %p97
      %s99 = ssub.s32 %s18, %s25
      %p100 = scmp.eq.s32.totalorder %s99, 0
      %s102 = sadd.s32 %s101, 1
      %s103 = scalar_select %p100, %s101, %s102
      %p106 = pneg %p100
      %p107 = scmp.eq.s32.totalorder %s18, 1
      %p108 = por %p106, %p107
      %p109 = scmp.ne.s32.totalorder %s101, %s104
      %p110 = scmp.eq.s32.totalorder %s18, 0
      %p111 = por %p109, %p110
      %p112 = scmp.ne.s32.totalorder %s101, %s104
      %p113 = scmp.eq.s32.totalorder %s23, 1
      %p114 = por %p112, %p113
      %p115 = scmp.ne.s32.totalorder %s104, %s105
      %p116 = scmp.eq.s32.totalorder %s23, 0
      %p117 = por %p115, %p116
      %p118 = scmp.ne.s32.totalorder %s104, %s105
      %p119 = scmp.eq.s32.totalorder %s24, 1
      %p120 = por %p118, %p119
      %p122 = scmp.ne.s32.totalorder %s105, %s121
      %p123 = scmp.eq.s32.totalorder %s24, 0
      %p124 = por %p122, %p123
      %p125 = scmp.le.s32.totalorder 1, %s18
      %p126 = scmp.lt.s32.totalorder %s18, 3
      %p127 = pnand %p125, %p126
      %p128 = pneg %p127
      // Predicated region
      $region9: #{tpu_custom_call.1} parent=5 // pred_check
        _
      $region10: #{tpu_custom_call.1} parent=5 // pred_check_branch
        %130 = sbr.rel (%p127) target = $region12
      $region11: #{tpu_custom_call.1} parent=5 // pred_region
        %s131 = ssub.s32 %s18, 1
        // Predicated region
        $region13: #{tpu_custom_call.1} parent=11 // pred_check
          %p132 = pneg %p91
        $region14: #{tpu_custom_call.1} parent=11 // pred_check_branch
          %134 = sbr.rel (%p132) target = $region16
        $region15: #{tpu_custom_call.1} parent=11 // pred_region
          _
        $region16: #{tpu_custom_call.1} parent=11 // pred_fallthru
          _
      $region12: #{tpu_custom_call.1} parent=5 // pred_fallthru
        _
      %p135 = scmp.lt.s32.totalorder %s18, 2
      // Predicated region
      $region17: #{tpu_custom_call.1} parent=5 // pred_check
        %p136 = pneg %p135
      $region18: #{tpu_custom_call.1} parent=5 // pred_check_branch
        %138 = sbr.rel (%p136) target = $region20
      $region19: #{tpu_custom_call.1} parent=5 // pred_region
        // Predicated region
        $region21: #{tpu_custom_call.1} parent=19 // pred_check
          %p139 = pneg %p38
        $region22: #{tpu_custom_call.1} parent=19 // pred_check_branch
          %141 = sbr.rel (%p139) target = $region24
        $region23: #{tpu_custom_call.1} parent=19 // pred_region
          %s142 = sand.u32 %s28, 1
          %s143 = scalar_lea.sflag [#allocation3], %s142
          %s144 = sand.u32 %s28, 1
          %s145 = smul.addr %s144, 6
          %s146 = scalar_lea.vmem [#allocation2], %s145
          %s147 = smul.u32 3, %s18
          %s149 = ssub.s32 96, 96
          %150 = vsyncadd %s143, %s149
          %s151 = smul.addr %s147, 32
          %s152 = scalar_lea.hbm %s0, %s151
          %s153 = sshll.u32 %s146, 4
          %s154 = int_to_ptr.vmem [resolvable:$true] %s153
          %159 = dma.hbm_to_vmem [thread:$0]  %s152, 96, %s154, %s143, 32, 32, 2
        $region24: #{tpu_custom_call.1} parent=19 // pred_fallthru
          _
        // Predicated region
        $region25: #{tpu_custom_call.1} parent=19 // pred_check
          %p160 = pneg %p64
        $region26: #{tpu_custom_call.1} parent=19 // pred_check_branch
          %162 = sbr.rel (%p160) target = $region28
        $region27: #{tpu_custom_call.1} parent=19 // pred_region
          %s163 = sand.u32 %s54, 1
          %s164 = scalar_lea.sflag [#allocation6], %s163
          %s165 = sand.u32 %s54, 1
          %s166 = smul.addr %s165, 576
          %s167 = scalar_lea.vmem [#allocation5], %s166
          %s168 = smul.u32 3, %s18
          %s170 = ssub.s32 9216, 9216
          %171 = vsyncadd %s164, %s170
          %s172 = smul.addr %s168, 48
          %s173 = smul.addr %s172, 64
          %s174 = scalar_lea.hbm %s1, %s173
          %s175 = sshll.u32 %s167, 4
          %s176 = int_to_ptr.vmem [resolvable:$true] %s175
          %181 = dma.hbm_to_vmem [thread:$0]  %s174, 9216, %s176, %s164, 64, 64, 4
        $region28: #{tpu_custom_call.1} parent=19 // pred_fallthru
          _
      $region20: #{tpu_custom_call.1} parent=5 // pred_fallthru
        _
      %p182 = scmp.le.s32.totalorder 1, %s18
      %p183 = scmp.lt.s32.totalorder %s18, 3
      %p184 = pnand %p182, %p183
      %p185 = pneg %p184
      // Predicated region
      $region29: #{tpu_custom_call.1} parent=5 // pred_check
        _
      $region30: #{tpu_custom_call.1} parent=5 // pred_check_branch
        %187 = sbr.rel (%p184) target = $region32
      $region31: #{tpu_custom_call.1} parent=5 // pred_region
        %s188 = ssub.s32 %s18, 1
        %s189 = sand.u32 %s31, 1
        %s190 = scalar_lea.sflag [#allocation3], %s189
        %s191 = sand.u32 %s31, 1
        %s192 = smul.addr %s191, 6
        %s193 = scalar_lea.vmem [#allocation2], %s192
        // Predicated region
        $region33: #{tpu_custom_call.1} parent=31 // pred_check
          %p194 = pneg %p44
        $region34: #{tpu_custom_call.1} parent=31 // pred_check_branch
          %196 = sbr.rel (%p194) target = $region36
        $region35: #{tpu_custom_call.1} parent=31 // pred_region
          %197 = dma.done %s190, 96
        $region36: #{tpu_custom_call.1} parent=31 // pred_fallthru
          _
        %s198 = sand.u32 %s57, 1
        %s199 = scalar_lea.sflag [#allocation6], %s198
        %s200 = sand.u32 %s57, 1
        %s201 = smul.addr %s200, 576
        %s202 = scalar_lea.vmem [#allocation5], %s201
        // Predicated region
        $region37: #{tpu_custom_call.1} parent=31 // pred_check
          %p203 = pneg %p70
        $region38: #{tpu_custom_call.1} parent=31 // pred_check_branch
          %205 = sbr.rel (%p203) target = $region40
        $region39: #{tpu_custom_call.1} parent=31 // pred_region
          %206 = dma.done %s199, 9216
        $region40: #{tpu_custom_call.1} parent=31 // pred_fallthru
          _
        %s207 = sand.u32 %s31, 1
        %s208 = scalar_lea.sflag [#allocation3], %s207
        %s209 = sand.u32 %s31, 1
        %s210 = smul.addr %s209, 6
        %s211 = scalar_lea.vmem [#allocation2], %s210
        %p212 = pneg %p44
        %p213 = pneg %p41
        %s214 = sand.u32 %s57, 1
        %s215 = scalar_lea.sflag [#allocation6], %s214
        %s216 = sand.u32 %s57, 1
        %s217 = smul.addr %s216, 576
        %s218 = scalar_lea.vmem [#allocation5], %s217
        %p219 = pneg %p70
        %p220 = pneg %p67
        %p221 = pneg %p91
        %p222 = pneg %p88
        %p223 = pneg %p117
        %p224 = pneg %p114
        %s225 = sand.u32 %s104, 1
        %s226 = scalar_lea.sflag [#allocation4], %s225
        %s227 = sand.u32 %s104, 1
        %s228 = smul.addr %s227, 6
        %s229 = scalar_lea.vmem [#allocation7], %s228
        %s230 = smul.u32 3, %s23
        %s231 = smul.u32 3, %s23
        %s232 = smul.u32 3, %s23
        %v234 = vld [vmem:[%s193] sm:$0x3]
        %v235 = vld [vmem:[%s202] sm:$0xf]
        %v236 = vld [vmem:[%s202 + $0x4] sm:$0xf]
        %v237 = vld [vmem:[%s202 + $0x8] sm:$0xf]
        %v238 = vld [vmem:[%s202 + $0xc] sm:$0xf]
        %v239 = vld [vmem:[%s202 + $0x10] sm:$0xf]
        %v240 = vld [vmem:[%s202 + $0x14] sm:$0xf]
        %v241 = vld [vmem:[%s202 + $0x18] sm:$0xf]
        %v242 = vld [vmem:[%s202 + $0x1c] sm:$0xf]
        %v243 = vld [vmem:[%s202 + $0x20] sm:$0xf]
        %v244 = vld [vmem:[%s202 + $0x24] sm:$0xf]
        %v245 = vld [vmem:[%s202 + $0x28] sm:$0xf]
        %v246 = vld [vmem:[%s202 + $0x2c] sm:$0xf]
        %v247 = vld [vmem:[%s202 + $0x30] sm:$0xf]
        %v248 = vld [vmem:[%s202 + $0x34] sm:$0xf]
        %v249 = vld [vmem:[%s202 + $0x38] sm:$0xf]
        %v250 = vld [vmem:[%s202 + $0x3c] sm:$0xf]
        %v251 = vpack.c.bf16 %v234, %v234
        %v252 = vld [vmem:[%s2] sm:$0x1]
        %v253 = vlaneseq
        %v254 = vshrl.u32 %v253, 7
        %v255 = vsub.s32 0, %v254
        %v256 = vrot.slane %v252, %v255
        %v273 = vunpack.c.l.b16 %v235
        %v274 = vunpack.c.l.b16 %v236
        %v275 = vunpack.c.l.b16 %v237
        %v276 = vunpack.c.l.b16 %v238
        %v277 = vunpack.c.l.b16 %v239
        %v278 = vunpack.c.l.b16 %v240
        %v279 = vunpack.c.l.b16 %v241
        %v280 = vunpack.c.l.b16 %v242
        %v281 = vunpack.c.l.b16 %v243
        %v282 = vunpack.c.l.b16 %v244
        %v283 = vunpack.c.l.b16 %v245
        %v284 = vunpack.c.l.b16 %v246
        %v285 = vunpack.c.l.b16 %v247
        %v286 = vunpack.c.l.b16 %v248
        %v287 = vunpack.c.l.b16 %v249
        %v288 = vunpack.c.l.b16 %v250
        %v289 = vpack.c.b16 %v274, %v273
        %v290 = vpack.c.b16 %v276, %v275
        %v291 = vpack.c.b16 %v278, %v277
        %v292 = vpack.c.b16 %v280, %v279
        %v293 = vpack.c.b16 %v282, %v281
        %v294 = vpack.c.b16 %v284, %v283
        %v295 = vpack.c.b16 %v286, %v285
        %v296 = vpack.c.b16 %v288, %v287
        %305 = vmatprep.subr.bf16.mxu0 0
        %306 = vmatpush1.bf16.xpose.msra.mxu0 %v289
        %307 = vmatprep.subr.bf16.mxu0 0
        %308 = vmatpush1.bf16.xpose.msra.mxu0 %v290
        %309 = vmatprep.subr.bf16.mxu0 0
        %310 = vmatpush1.bf16.xpose.msra.mxu0 %v291
        %311 = vmatprep.subr.bf16.mxu0 0
        %312 = vmatpush1.bf16.xpose.msra.mxu0 %v292
        %313 = vmatprep.subr.bf16.mxu0 0
        %314 = vmatpush1.bf16.xpose.msra.mxu0 %v293
        %315 = vmatprep.subr.bf16.mxu0 0
        %316 = vmatpush1.bf16.xpose.msra.mxu0 %v294
        %317 = vmatprep.subr.bf16.mxu0 0
        %318 = vmatpush1.bf16.xpose.msra.mxu0 %v295
        %319 = vmatprep.subr.bf16.mxu0 0
        %320 = vmatpush1.bf16.xpose.msra.mxu0 %v296
        %321 = vmatprep.subr.bf16.mxu0 0
        %322 = vmatpush1.bf16.xpose.msra.mxu0 0
        %323 = vmatprep.subr.bf16.mxu0 0
        %324 = vmatpush1.bf16.xpose.msra.mxu0 0
        %325 = vmatprep.subr.bf16.mxu0 0
        %326 = vmatpush1.bf16.xpose.msra.mxu0 0
        %327 = vmatprep.subr.bf16.mxu0 0
        %328 = vmatpush1.bf16.xpose.msra.mxu0 0
        %329 = vmatprep.subr.bf16.mxu0 0
        %330 = vmatpush1.bf16.xpose.msra.mxu0 0
        %331 = vmatprep.subr.bf16.mxu0 0
        %332 = vmatpush1.bf16.xpose.msra.mxu0 0
        %333 = vmatprep.subr.bf16.mxu0 0
        %334 = vmatpush1.bf16.xpose.msra.mxu0 0
        %335 = vmatprep.subr.bf16.mxu0 0
        %336 = vmatpush1.bf16.xpose.msra.mxu0 0
        %337 = vmatprep.mubr.bf16.mxu0 0
        %338 = vmatmul.mubr.bf16.gmra.mrb[0].mxu0 %v251
        %v339 = vpop.f32.mrb[0].mxu0
        %v340 = vadd.f32 %v256, %v339
        %v341 = vpop.f32.mrb[0].mxu0
        %v342 = vpop.f32.mrb[0].mxu0
        %v343 = vpop.f32.mrb[0].mxu0
        %344 = vdwg.mxu0
        %v345 = vmul.f32 %v340, 0.2
        %v346 = vmax.f32 %v340, %v345
        %s347 = scalar_lea.vmem %s202, 64 [#allocation5]
        %v348 = vld [vmem:[%s347] sm:$0xf]
        %v349 = vld [vmem:[%s347 + $0x4] sm:$0xf]
        %v350 = vld [vmem:[%s347 + $0x8] sm:$0xf]
        %v351 = vld [vmem:[%s347 + $0xc] sm:$0xf]
        %v352 = vld [vmem:[%s347 + $0x10] sm:$0xf]
        %v353 = vld [vmem:[%s347 + $0x14] sm:$0xf]
        %v354 = vld [vmem:[%s347 + $0x18] sm:$0xf]
        %v355 = vld [vmem:[%s347 + $0x1c] sm:$0xf]
        %v356 = vld [vmem:[%s347 + $0x20] sm:$0xf]
        %v357 = vld [vmem:[%s347 + $0x24] sm:$0xf]
        %v358 = vld [vmem:[%s347 + $0x28] sm:$0xf]
        %v359 = vld [vmem:[%s347 + $0x2c] sm:$0xf]
        %v360 = vld [vmem:[%s347 + $0x30] sm:$0xf]
        %v361 = vld [vmem:[%s347 + $0x34] sm:$0xf]
        %v362 = vld [vmem:[%s347 + $0x38] sm:$0xf]
        %v363 = vld [vmem:[%s347 + $0x3c] sm:$0xf]
        %v364 = vpack.c.bf16 %v346, %v346
        %v365 = vld [vmem:[%s2 + $0x1] sm:$0x1]
        %v366 = vlaneseq
        %v367 = vshrl.u32 %v366, 7
        %v368 = vsub.s32 0, %v367
        %v369 = vrot.slane %v365, %v368
        %v386 = vunpack.c.l.b16 %v348
        %v387 = vunpack.c.l.b16 %v349
        %v388 = vunpack.c.l.b16 %v350
        %v389 = vunpack.c.l.b16 %v351
        %v390 = vunpack.c.l.b16 %v352
        %v391 = vunpack.c.l.b16 %v353
        %v392 = vunpack.c.l.b16 %v354
        %v393 = vunpack.c.l.b16 %v355
        %v394 = vunpack.c.l.b16 %v356
        %v395 = vunpack.c.l.b16 %v357
        %v396 = vunpack.c.l.b16 %v358
        %v397 = vunpack.c.l.b16 %v359
        %v398 = vunpack.c.l.b16 %v360
        %v399 = vunpack.c.l.b16 %v361
        %v400 = vunpack.c.l.b16 %v362
        %v401 = vunpack.c.l.b16 %v363
        %v402 = vpack.c.b16 %v387, %v386
        %v403 = vpack.c.b16 %v389, %v388
        %v404 = vpack.c.b16 %v391, %v390
        %v405 = vpack.c.b16 %v393, %v392
        %v406 = vpack.c.b16 %v395, %v394
        %v407 = vpack.c.b16 %v397, %v396
        %v408 = vpack.c.b16 %v399, %v398
        %v409 = vpack.c.b16 %v401, %v400
        %418 = vmatprep.subr.bf16.mxu0 0
        %419 = vmatpush1.bf16.xpose.msra.mxu0 %v402
        %420 = vmatprep.subr.bf16.mxu0 0
        %421 = vmatpush1.bf16.xpose.msra.mxu0 %v403
        %422 = vmatprep.subr.bf16.mxu0 0
        %423 = vmatpush1.bf16.xpose.msra.mxu0 %v404
        %424 = vmatprep.subr.bf16.mxu0 0
        %425 = vmatpush1.bf16.xpose.msra.mxu0 %v405
        %426 = vmatprep.subr.bf16.mxu0 0
        %427 = vmatpush1.bf16.xpose.msra.mxu0 %v406
        %428 = vmatprep.subr.bf16.mxu0 0
        %429 = vmatpush1.bf16.xpose.msra.mxu0 %v407
        %430 = vmatprep.subr.bf16.mxu0 0
        %431 = vmatpush1.bf16.xpose.msra.mxu0 %v408
        %432 = vmatprep.subr.bf16.mxu0 0
        %433 = vmatpush1.bf16.xpose.msra.mxu0 %v409
        %434 = vmatprep.subr.bf16.mxu0 0
        %435 = vmatpush1.bf16.xpose.msra.mxu0 0
        %436 = vmatprep.subr.bf16.mxu0 0
        %437 = vmatpush1.bf16.xpose.msra.mxu0 0
        %438 = vmatprep.subr.bf16.mxu0 0
        %439 = vmatpush1.bf16.xpose.msra.mxu0 0
        %440 = vmatprep.subr.bf16.mxu0 0
        %441 = vmatpush1.bf16.xpose.msra.mxu0 0
        %442 = vmatprep.subr.bf16.mxu0 0
        %443 = vmatpush1.bf16.xpose.msra.mxu0 0
        %444 = vmatprep.subr.bf16.mxu0 0
        %445 = vmatpush1.bf16.xpose.msra.mxu0 0
        %446 = vmatprep.subr.bf16.mxu0 0
        %447 = vmatpush1.bf16.xpose.msra.mxu0 0
        %448 = vmatprep.subr.bf16.mxu0 0
        %449 = vmatpush1.bf16.xpose.msra.mxu0 0
        %450 = vmatprep.mubr.bf16.mxu0 0
        %451 = vmatmul.mubr.bf16.gmra.mrb[0].mxu0 %v364
        %v452 = vpop.f32.mrb[0].mxu0
        %v453 = vadd.f32 %v369, %v452
        %v454 = vpop.f32.mrb[0].mxu0
        %v455 = vpop.f32.mrb[0].mxu0
        %v456 = vpop.f32.mrb[0].mxu0
        %457 = vdwg.mxu0
        %v458 = vmul.f32 %v453, 0.2
        %v459 = vmax.f32 %v453, %v458
        %s460 = scalar_lea.vmem %s202, 128 [#allocation5]
        %v461 = vld [vmem:[%s460] sm:$0xf]
        %v462 = vld [vmem:[%s460 + $0x4] sm:$0xf]
        %v463 = vld [vmem:[%s460 + $0x8] sm:$0xf]
        %v464 = vld [vmem:[%s460 + $0xc] sm:$0xf]
        %v465 = vld [vmem:[%s460 + $0x10] sm:$0xf]
        %v466 = vld [vmem:[%s460 + $0x14] sm:$0xf]
        %v467 = vld [vmem:[%s460 + $0x18] sm:$0xf]
        %v468 = vld [vmem:[%s460 + $0x1c] sm:$0xf]
        %v469 = vld [vmem:[%s460 + $0x20] sm:$0xf]
        %v470 = vld [vmem:[%s460 + $0x24] sm:$0xf]
        %v471 = vld [vmem:[%s460 + $0x28] sm:$0xf]
        %v472 = vld [vmem:[%s460 + $0x2c] sm:$0xf]
        %v473 = vld [vmem:[%s460 + $0x30] sm:$0xf]
        %v474 = vld [vmem:[%s460 + $0x34] sm:$0xf]
        %v475 = vld [vmem:[%s460 + $0x38] sm:$0xf]
        %v476 = vld [vmem:[%s460 + $0x3c] sm:$0xf]
        %v477 = vpack.c.bf16 %v459, %v459
        %v478 = vld [vmem:[%s2 + $0x2] sm:$0x1]
        %v479 = vlaneseq
        %v480 = vshrl.u32 %v479, 7
        %v481 = vsub.s32 0, %v480
        %v482 = vrot.slane %v478, %v481
        %v499 = vunpack.c.l.b16 %v461
        %v500 = vunpack.c.l.b16 %v462
        %v501 = vunpack.c.l.b16 %v463
        %v502 = vunpack.c.l.b16 %v464
        %v503 = vunpack.c.l.b16 %v465
        %v504 = vunpack.c.l.b16 %v466
        %v505 = vunpack.c.l.b16 %v467
        %v506 = vunpack.c.l.b16 %v468
        %v507 = vunpack.c.l.b16 %v469
        %v508 = vunpack.c.l.b16 %v470
        %v509 = vunpack.c.l.b16 %v471
        %v510 = vunpack.c.l.b16 %v472
        %v511 = vunpack.c.l.b16 %v473
        %v512 = vunpack.c.l.b16 %v474
        %v513 = vunpack.c.l.b16 %v475
        %v514 = vunpack.c.l.b16 %v476
        %v515 = vpack.c.b16 %v500, %v499
        %v516 = vpack.c.b16 %v502, %v501
        %v517 = vpack.c.b16 %v504, %v503
        %v518 = vpack.c.b16 %v506, %v505
        %v519 = vpack.c.b16 %v508, %v507
        %v520 = vpack.c.b16 %v510, %v509
        %v521 = vpack.c.b16 %v512, %v511
        %v522 = vpack.c.b16 %v514, %v513
        %531 = vmatprep.subr.bf16.mxu0 0
        %532 = vmatpush1.bf16.xpose.msra.mxu0 %v515
        %533 = vmatprep.subr.bf16.mxu0 0
        %534 = vmatpush1.bf16.xpose.msra.mxu0 %v516
        %535 = vmatprep.subr.bf16.mxu0 0
        %536 = vmatpush1.bf16.xpose.msra.mxu0 %v517
        %537 = vmatprep.subr.bf16.mxu0 0
        %538 = vmatpush1.bf16.xpose.msra.mxu0 %v518
        %539 = vmatprep.subr.bf16.mxu0 0
        %540 = vmatpush1.bf16.xpose.msra.mxu0 %v519
        %541 = vmatprep.subr.bf16.mxu0 0
        %542 = vmatpush1.bf16.xpose.msra.mxu0 %v520
        %543 = vmatprep.subr.bf16.mxu0 0
        %544 = vmatpush1.bf16.xpose.msra.mxu0 %v521
        %545 = vmatprep.subr.bf16.mxu0 0
        %546 = vmatpush1.bf16.xpose.msra.mxu0 %v522
        %547 = vmatprep.subr.bf16.mxu0 0
        %548 = vmatpush1.bf16.xpose.msra.mxu0 0
        %549 = vmatprep.subr.bf16.mxu0 0
        %550 = vmatpush1.bf16.xpose.msra.mxu0 0
        %551 = vmatprep.subr.bf16.mxu0 0
        %552 = vmatpush1.bf16.xpose.msra.mxu0 0
        %553 = vmatprep.subr.bf16.mxu0 0
        %554 = vmatpush1.bf16.xpose.msra.mxu0 0
        %555 = vmatprep.subr.bf16.mxu0 0
        %556 = vmatpush1.bf16.xpose.msra.mxu0 0
        %557 = vmatprep.subr.bf16.mxu0 0
        %558 = vmatpush1.bf16.xpose.msra.mxu0 0
        %559 = vmatprep.subr.bf16.mxu0 0
        %560 = vmatpush1.bf16.xpose.msra.mxu0 0
        %561 = vmatprep.subr.bf16.mxu0 0
        %562 = vmatpush1.bf16.xpose.msra.mxu0 0
        %563 = vmatprep.mubr.bf16.mxu0 0
        %564 = vmatmul.mubr.bf16.gmra.mrb[0].mxu0 %v477
        %v565 = vpop.f32.mrb[0].mxu0
        %v566 = vadd.f32 %v482, %v565
        %v567 = vpop.f32.mrb[0].mxu0
        %v568 = vpop.f32.mrb[0].mxu0
        %v569 = vpop.f32.mrb[0].mxu0
        %570 = vdwg.mxu0
        %v571 = vmul.f32 %v566, 0.2
        %v572 = vmax.f32 %v566, %v571
        %573 = vst [vmem:[%s229] sm:$0x3] %v572
        %s574 = scalar_lea.vmem %s193, 2 [#allocation2]
        %v575 = vld [vmem:[%s574] sm:$0x3]
        %s576 = scalar_lea.vmem %s202, 192 [#allocation5]
        %v577 = vld [vmem:[%s576] sm:$0xf]
        %v578 = vld [vmem:[%s576 + $0x4] sm:$0xf]
        %v579 = vld [vmem:[%s576 + $0x8] sm:$0xf]
        %v580 = vld [vmem:[%s576 + $0xc] sm:$0xf]
        %v581 = vld [vmem:[%s576 + $0x10] sm:$0xf]
        %v582 = vld [vmem:[%s576 + $0x14] sm:$0xf]
        %v583 = vld [vmem:[%s576 + $0x18] sm:$0xf]
        %v584 = vld [vmem:[%s576 + $0x1c] sm:$0xf]
        %v585 = vld [vmem:[%s576 + $0x20] sm:$0xf]
        %v586 = vld [vmem:[%s576 + $0x24] sm:$0xf]
        %v587 = vld [vmem:[%s576 + $0x28] sm:$0xf]
        %v588 = vld [vmem:[%s576 + $0x2c] sm:$0xf]
        %v589 = vld [vmem:[%s576 + $0x30] sm:$0xf]
        %v590 = vld [vmem:[%s576 + $0x34] sm:$0xf]
        %v591 = vld [vmem:[%s576 + $0x38] sm:$0xf]
        %v592 = vld [vmem:[%s576 + $0x3c] sm:$0xf]
        %v593 = vpack.c.bf16 %v575, %v575
        %v594 = vld [vmem:[%s2] sm:$0x1]
        %v595 = vlaneseq
        %v596 = vshrl.u32 %v595, 7
        %v597 = vsub.s32 0, %v596
        %v598 = vrot.slane %v594, %v597
        %v615 = vunpack.c.l.b16 %v577
        %v616 = vunpack.c.l.b16 %v578
        %v617 = vunpack.c.l.b16 %v579
        %v618 = vunpack.c.l.b16 %v580
        %v619 = vunpack.c.l.b16 %v581
        %v620 = vunpack.c.l.b16 %v582
        %v621 = vunpack.c.l.b16 %v583
        %v622 = vunpack.c.l.b16 %v584
        %v623 = vunpack.c.l.b16 %v585
        %v624 = vunpack.c.l.b16 %v586
        %v625 = vunpack.c.l.b16 %v587
        %v626 = vunpack.c.l.b16 %v588
        %v627 = vunpack.c.l.b16 %v589
        %v628 = vunpack.c.l.b16 %v590
        %v629 = vunpack.c.l.b16 %v591
        %v630 = vunpack.c.l.b16 %v592
        %v631 = vpack.c.b16 %v616, %v615
        %v632 = vpack.c.b16 %v618, %v617
        %v633 = vpack.c.b16 %v620, %v619
        %v634 = vpack.c.b16 %v622, %v621
        %v635 = vpack.c.b16 %v624, %v623
        %v636 = vpack.c.b16 %v626, %v625
        %v637 = vpack.c.b16 %v628, %v627
        %v638 = vpack.c.b16 %v630, %v629
        %647 = vmatprep.subr.bf16.mxu0 0
        %648 = vmatpush1.bf16.xpose.msra.mxu0 %v631
        %649 = vmatprep.subr.bf16.mxu0 0
        %650 = vmatpush1.bf16.xpose.msra.mxu0 %v632
        %651 = vmatprep.subr.bf16.mxu0 0
        %652 = vmatpush1.bf16.xpose.msra.mxu0 %v633
        %653 = vmatprep.subr.bf16.mxu0 0
        %654 = vmatpush1.bf16.xpose.msra.mxu0 %v634
        %655 = vmatprep.subr.bf16.mxu0 0
        %656 = vmatpush1.bf16.xpose.msra.mxu0 %v635
        %657 = vmatprep.subr.bf16.mxu0 0
        %658 = vmatpush1.bf16.xpose.msra.mxu0 %v636
        %659 = vmatprep.subr.bf16.mxu0 0
        %660 = vmatpush1.bf16.xpose.msra.mxu0 %v637
        %661 = vmatprep.subr.bf16.mxu0 0
        %662 = vmatpush1.bf16.xpose.msra.mxu0 %v638
        %663 = vmatprep.subr.bf16.mxu0 0
        %664 = vmatpush1.bf16.xpose.msra.mxu0 0
        %665 = vmatprep.subr.bf16.mxu0 0
        %666 = vmatpush1.bf16.xpose.msra.mxu0 0
        %667 = vmatprep.subr.bf16.mxu0 0
        %668 = vmatpush1.bf16.xpose.msra.mxu0 0
        %669 = vmatprep.subr.bf16.mxu0 0
        %670 = vmatpush1.bf16.xpose.msra.mxu0 0
        %671 = vmatprep.subr.bf16.mxu0 0
        %672 = vmatpush1.bf16.xpose.msra.mxu0 0
        %673 = vmatprep.subr.bf16.mxu0 0
        %674 = vmatpush1.bf16.xpose.msra.mxu0 0
        %675 = vmatprep.subr.bf16.mxu0 0
        %676 = vmatpush1.bf16.xpose.msra.mxu0 0
        %677 = vmatprep.subr.bf16.mxu0 0
        %678 = vmatpush1.bf16.xpose.msra.mxu0 0
        %679 = vmatprep.mubr.bf16.mxu0 0
        %680 = vmatmul.mubr.bf16.gmra.mrb[0].mxu0 %v593
        %v681 = vpop.f32.mrb[0].mxu0
        %v682 = vadd.f32 %v598, %v681
        %v683 = vpop.f32.mrb[0].mxu0
        %v684 = vpop.f32.mrb[0].mxu0
        %v685 = vpop.f32.mrb[0].mxu0
        %686 = vdwg.mxu0
        %v687 = vmul.f32 %v682, 0.2
        %v688 = vmax.f32 %v682, %v687
        %s689 = scalar_lea.vmem %s202, 256 [#allocation5]
        %v690 = vld [vmem:[%s689] sm:$0xf]
        %v691 = vld [vmem:[%s689 + $0x4] sm:$0xf]
        %v692 = vld [vmem:[%s689 + $0x8] sm:$0xf]
        %v693 = vld [vmem:[%s689 + $0xc] sm:$0xf]
        %v694 = vld [vmem:[%s689 + $0x10] sm:$0xf]
        %v695 = vld [vmem:[%s689 + $0x14] sm:$0xf]
        %v696 = vld [vmem:[%s689 + $0x18] sm:$0xf]
        %v697 = vld [vmem:[%s689 + $0x1c] sm:$0xf]
        %v698 = vld [vmem:[%s689 + $0x20] sm:$0xf]
        %v699 = vld [vmem:[%s689 + $0x24] sm:$0xf]
        %v700 = vld [vmem:[%s689 + $0x28] sm:$0xf]
        %v701 = vld [vmem:[%s689 + $0x2c] sm:$0xf]
        %v702 = vld [vmem:[%s689 + $0x30] sm:$0xf]
        %v703 = vld [vmem:[%s689 + $0x34] sm:$0xf]
        %v704 = vld [vmem:[%s689 + $0x38] sm:$0xf]
        %v705 = vld [vmem:[%s689 + $0x3c] sm:$0xf]
        %v706 = vpack.c.bf16 %v688, %v688
        %v707 = vld [vmem:[%s2 + $0x1] sm:$0x1]
        %v708 = vlaneseq
        %v709 = vshrl.u32 %v708, 7
        %v710 = vsub.s32 0, %v709
        %v711 = vrot.slane %v707, %v710
        %v728 = vunpack.c.l.b16 %v690
        %v729 = vunpack.c.l.b16 %v691
        %v730 = vunpack.c.l.b16 %v692
        %v731 = vunpack.c.l.b16 %v693
        %v732 = vunpack.c.l.b16 %v694
        %v733 = vunpack.c.l.b16 %v695
        %v734 = vunpack.c.l.b16 %v696
        %v735 = vunpack.c.l.b16 %v697
        %v736 = vunpack.c.l.b16 %v698
        %v737 = vunpack.c.l.b16 %v699
        %v738 = vunpack.c.l.b16 %v700
        %v739 = vunpack.c.l.b16 %v701
        %v740 = vunpack.c.l.b16 %v702
        %v741 = vunpack.c.l.b16 %v703
        %v742 = vunpack.c.l.b16 %v704
        %v743 = vunpack.c.l.b16 %v705
        %v744 = vpack.c.b16 %v729, %v728
        %v745 = vpack.c.b16 %v731, %v730
        %v746 = vpack.c.b16 %v733, %v732
        %v747 = vpack.c.b16 %v735, %v734
        %v748 = vpack.c.b16 %v737, %v736
        %v749 = vpack.c.b16 %v739, %v738
        %v750 = vpack.c.b16 %v741, %v740
        %v751 = vpack.c.b16 %v743, %v742
        %760 = vmatprep.subr.bf16.mxu0 0
        %761 = vmatpush1.bf16.xpose.msra.mxu0 %v744
        %762 = vmatprep.subr.bf16.mxu0 0
        %763 = vmatpush1.bf16.xpose.msra.mxu0 %v745
        %764 = vmatprep.subr.bf16.mxu0 0
        %765 = vmatpush1.bf16.xpose.msra.mxu0 %v746
        %766 = vmatprep.subr.bf16.mxu0 0
        %767 = vmatpush1.bf16.xpose.msra.mxu0 %v747
        %768 = vmatprep.subr.bf16.mxu0 0
        %769 = vmatpush1.bf16.xpose.msra.mxu0 %v748
        %770 = vmatprep.subr.bf16.mxu0 0
        %771 = vmatpush1.bf16.xpose.msra.mxu0 %v749
        %772 = vmatprep.subr.bf16.mxu0 0
        %773 = vmatpush1.bf16.xpose.msra.mxu0 %v750
        %774 = vmatprep.subr.bf16.mxu0 0
        %775 = vmatpush1.bf16.xpose.msra.mxu0 %v751
        %776 = vmatprep.subr.bf16.mxu0 0
        %777 = vmatpush1.bf16.xpose.msra.mxu0 0
        %778 = vmatprep.subr.bf16.mxu0 0
        %779 = vmatpush1.bf16.xpose.msra.mxu0 0
        %780 = vmatprep.subr.bf16.mxu0 0
        %781 = vmatpush1.bf16.xpose.msra.mxu0 0
        %782 = vmatprep.subr.bf16.mxu0 0
        %783 = vmatpush1.bf16.xpose.msra.mxu0 0
        %784 = vmatprep.subr.bf16.mxu0 0
        %785 = vmatpush1.bf16.xpose.msra.mxu0 0
        %786 = vmatprep.subr.bf16.mxu0 0
        %787 = vmatpush1.bf16.xpose.msra.mxu0 0
        %788 = vmatprep.subr.bf16.mxu0 0
        %789 = vmatpush1.bf16.xpose.msra.mxu0 0
        %790 = vmatprep.subr.bf16.mxu0 0
        %791 = vmatpush1.bf16.xpose.msra.mxu0 0
        %792 = vmatprep.mubr.bf16.mxu0 0
        %793 = vmatmul.mubr.bf16.gmra.mrb[0].mxu0 %v706
        %v794 = vpop.f32.mrb[0].mxu0
        %v795 = vadd.f32 %v711, %v794
        %v796 = vpop.f32.mrb[0].mxu0
        %v797 = vpop.f32.mrb[0].mxu0
        %v798 = vpop.f32.mrb[0].mxu0
        %799 = vdwg.mxu0
        %v800 = vmul.f32 %v795, 0.2
        %v801 = vmax.f32 %v795, %v800
        %s802 = scalar_lea.vmem %s202, 320 [#allocation5]
        %v803 = vld [vmem:[%s802] sm:$0xf]
        %v804 = vld [vmem:[%s802 + $0x4] sm:$0xf]
        %v805 = vld [vmem:[%s802 + $0x8] sm:$0xf]
        %v806 = vld [vmem:[%s802 + $0xc] sm:$0xf]
        %v807 = vld [vmem:[%s802 + $0x10] sm:$0xf]
        %v808 = vld [vmem:[%s802 + $0x14] sm:$0xf]
        %v809 = vld [vmem:[%s802 + $0x18] sm:$0xf]
        %v810 = vld [vmem:[%s802 + $0x1c] sm:$0xf]
        %v811 = vld [vmem:[%s802 + $0x20] sm:$0xf]
        %v812 = vld [vmem:[%s802 + $0x24] sm:$0xf]
        %v813 = vld [vmem:[%s802 + $0x28] sm:$0xf]
        %v814 = vld [vmem:[%s802 + $0x2c] sm:$0xf]
        %v815 = vld [vmem:[%s802 + $0x30] sm:$0xf]
        %v816 = vld [vmem:[%s802 + $0x34] sm:$0xf]
        %v817 = vld [vmem:[%s802 + $0x38] sm:$0xf]
        %v818 = vld [vmem:[%s802 + $0x3c] sm:$0xf]
        %v819 = vpack.c.bf16 %v801, %v801
        %v820 = vld [vmem:[%s2 + $0x2] sm:$0x1]
        %v821 = vlaneseq
        %v822 = vshrl.u32 %v821, 7
        %v823 = vsub.s32 0, %v822
        %v824 = vrot.slane %v820, %v823
        %v841 = vunpack.c.l.b16 %v803
        %v842 = vunpack.c.l.b16 %v804
        %v843 = vunpack.c.l.b16 %v805
        %v844 = vunpack.c.l.b16 %v806
        %v845 = vunpack.c.l.b16 %v807
        %v846 = vunpack.c.l.b16 %v808
        %v847 = vunpack.c.l.b16 %v809
        %v848 = vunpack.c.l.b16 %v810
        %v849 = vunpack.c.l.b16 %v811
        %v850 = vunpack.c.l.b16 %v812
        %v851 = vunpack.c.l.b16 %v813
        %v852 = vunpack.c.l.b16 %v814
        %v853 = vunpack.c.l.b16 %v815
        %v854 = vunpack.c.l.b16 %v816
        %v855 = vunpack.c.l.b16 %v817
        %v856 = vunpack.c.l.b16 %v818
        %v857 = vpack.c.b16 %v842, %v841
        %v858 = vpack.c.b16 %v844, %v843
        %v859 = vpack.c.b16 %v846, %v845
        %v860 = vpack.c.b16 %v848, %v847
        %v861 = vpack.c.b16 %v850, %v849
        %v862 = vpack.c.b16 %v852, %v851
        %v863 = vpack.c.b16 %v854, %v853
        %v864 = vpack.c.b16 %v856, %v855
        %873 = vmatprep.subr.bf16.mxu0 0
        %874 = vmatpush1.bf16.xpose.msra.mxu0 %v857
        %875 = vmatprep.subr.bf16.mxu0 0
        %876 = vmatpush1.bf16.xpose.msra.mxu0 %v858
        %877 = vmatprep.subr.bf16.mxu0 0
        %878 = vmatpush1.bf16.xpose.msra.mxu0 %v859
        %879 = vmatprep.subr.bf16.mxu0 0
        %880 = vmatpush1.bf16.xpose.msra.mxu0 %v860
        %881 = vmatprep.subr.bf16.mxu0 0
        %882 = vmatpush1.bf16.xpose.msra.mxu0 %v861
        %883 = vmatprep.subr.bf16.mxu0 0
        %884 = vmatpush1.bf16.xpose.msra.mxu0 %v862
        %885 = vmatprep.subr.bf16.mxu0 0
        %886 = vmatpush1.bf16.xpose.msra.mxu0 %v863
        %887 = vmatprep.subr.bf16.mxu0 0
        %888 = vmatpush1.bf16.xpose.msra.mxu0 %v864
        %889 = vmatprep.subr.bf16.mxu0 0
        %890 = vmatpush1.bf16.xpose.msra.mxu0 0
        %891 = vmatprep.subr.bf16.mxu0 0
        %892 = vmatpush1.bf16.xpose.msra.mxu0 0
        %893 = vmatprep.subr.bf16.mxu0 0
        %894 = vmatpush1.bf16.xpose.msra.mxu0 0
        %895 = vmatprep.subr.bf16.mxu0 0
        %896 = vmatpush1.bf16.xpose.msra.mxu0 0
        %897 = vmatprep.subr.bf16.mxu0 0
        %898 = vmatpush1.bf16.xpose.msra.mxu0 0
        %899 = vmatprep.subr.bf16.mxu0 0
        %900 = vmatpush1.bf16.xpose.msra.mxu0 0
        %901 = vmatprep.subr.bf16.mxu0 0
        %902 = vmatpush1.bf16.xpose.msra.mxu0 0
        %903 = vmatprep.subr.bf16.mxu0 0
        %904 = vmatpush1.bf16.xpose.msra.mxu0 0
        %905 = vmatprep.mubr.bf16.mxu0 0
        %906 = vmatmul.mubr.bf16.gmra.mrb[0].mxu0 %v819
        %v907 = vpop.f32.mrb[0].mxu0
        %v908 = vadd.f32 %v824, %v907
        %v909 = vpop.f32.mrb[0].mxu0
        %v910 = vpop.f32.mrb[0].mxu0
        %v911 = vpop.f32.mrb[0].mxu0
        %912 = vdwg.mxu0
        %v913 = vmul.f32 %v908, 0.2
        %v914 = vmax.f32 %v908, %v913
        %s915 = scalar_lea.vmem %s229, 2 [#allocation7]
        %916 = vst [vmem:[%s915] sm:$0x3] %v914
        %s917 = scalar_lea.vmem %s193, 4 [#allocation2]
        %v918 = vld [vmem:[%s917] sm:$0x3]
        %s919 = scalar_lea.vmem %s202, 384 [#allocation5]
        %v920 = vld [vmem:[%s919] sm:$0xf]
        %v921 = vld [vmem:[%s919 + $0x4] sm:$0xf]
        %v922 = vld [vmem:[%s919 + $0x8] sm:$0xf]
        %v923 = vld [vmem:[%s919 + $0xc] sm:$0xf]
        %v924 = vld [vmem:[%s919 + $0x10] sm:$0xf]
        %v925 = vld [vmem:[%s919 + $0x14] sm:$0xf]
        %v926 = vld [vmem:[%s919 + $0x18] sm:$0xf]
        %v927 = vld [vmem:[%s919 + $0x1c] sm:$0xf]
        %v928 = vld [vmem:[%s919 + $0x20] sm:$0xf]
        %v929 = vld [vmem:[%s919 + $0x24] sm:$0xf]
        %v930 = vld [vmem:[%s919 + $0x28] sm:$0xf]
        %v931 = vld [vmem:[%s919 + $0x2c] sm:$0xf]
        %v932 = vld [vmem:[%s919 + $0x30] sm:$0xf]
        %v933 = vld [vmem:[%s919 + $0x34] sm:$0xf]
        %v934 = vld [vmem:[%s919 + $0x38] sm:$0xf]
        %v935 = vld [vmem:[%s919 + $0x3c] sm:$0xf]
        %v936 = vpack.c.bf16 %v918, %v918
        %v937 = vld [vmem:[%s2] sm:$0x1]
        %v938 = vlaneseq
        %v939 = vshrl.u32 %v938, 7
        %v940 = vsub.s32 0, %v939
        %v941 = vrot.slane %v937, %v940
        %v958 = vunpack.c.l.b16 %v920
        %v959 = vunpack.c.l.b16 %v921
        %v960 = vunpack.c.l.b16 %v922
        %v961 = vunpack.c.l.b16 %v923
        %v962 = vunpack.c.l.b16 %v924
        %v963 = vunpack.c.l.b16 %v925
        %v964 = vunpack.c.l.b16 %v926
        %v965 = vunpack.c.l.b16 %v927
        %v966 = vunpack.c.l.b16 %v928
        %v967 = vunpack.c.l.b16 %v929
        %v968 = vunpack.c.l.b16 %v930
        %v969 = vunpack.c.l.b16 %v931
        %v970 = vunpack.c.l.b16 %v932
        %v971 = vunpack.c.l.b16 %v933
        %v972 = vunpack.c.l.b16 %v934
        %v973 = vunpack.c.l.b16 %v935
        %v974 = vpack.c.b16 %v959, %v958
        %v975 = vpack.c.b16 %v961, %v960
        %v976 = vpack.c.b16 %v963, %v962
        %v977 = vpack.c.b16 %v965, %v964
        %v978 = vpack.c.b16 %v967, %v966
        %v979 = vpack.c.b16 %v969, %v968
        %v980 = vpack.c.b16 %v971, %v970
        %v981 = vpack.c.b16 %v973, %v972
        %990 = vmatprep.subr.bf16.mxu0 0
        %991 = vmatpush1.bf16.xpose.msra.mxu0 %v974
        %992 = vmatprep.subr.bf16.mxu0 0
        %993 = vmatpush1.bf16.xpose.msra.mxu0 %v975
        %994 = vmatprep.subr.bf16.mxu0 0
        %995 = vmatpush1.bf16.xpose.msra.mxu0 %v976
        %996 = vmatprep.subr.bf16.mxu0 0
        %997 = vmatpush1.bf16.xpose.msra.mxu0 %v977
        %998 = vmatprep.subr.bf16.mxu0 0
        %999 = vmatpush1.bf16.xpose.msra.mxu0 %v978
        %1000 = vmatprep.subr.bf16.mxu0 0
        %1001 = vmatpush1.bf16.xpose.msra.mxu0 %v979
        %1002 = vmatprep.subr.bf16.mxu0 0
        %1003 = vmatpush1.bf16.xpose.msra.mxu0 %v980
        %1004 = vmatprep.subr.bf16.mxu0 0
        %1005 = vmatpush1.bf16.xpose.msra.mxu0 %v981
        %1006 = vmatprep.subr.bf16.mxu0 0
        %1007 = vmatpush1.bf16.xpose.msra.mxu0 0
        %1008 = vmatprep.subr.bf16.mxu0 0
        %1009 = vmatpush1.bf16.xpose.msra.mxu0 0
        %1010 = vmatprep.subr.bf16.mxu0 0
        %1011 = vmatpush1.bf16.xpose.msra.mxu0 0
        %1012 = vmatprep.subr.bf16.mxu0 0
        %1013 = vmatpush1.bf16.xpose.msra.mxu0 0
        %1014 = vmatprep.subr.bf16.mxu0 0
        %1015 = vmatpush1.bf16.xpose.msra.mxu0 0
        %1016 = vmatprep.subr.bf16.mxu0 0
        %1017 = vmatpush1.bf16.xpose.msra.mxu0 0
        %1018 = vmatprep.subr.bf16.mxu0 0
        %1019 = vmatpush1.bf16.xpose.msra.mxu0 0
        %1020 = vmatprep.subr.bf16.mxu0 0
        %1021 = vmatpush1.bf16.xpose.msra.mxu0 0
        %1022 = vmatprep.mubr.bf16.mxu0 0
        %1023 = vmatmul.mubr.bf16.gmra.mrb[0].mxu0 %v936
        %v1024 = vpop.f32.mrb[0].mxu0
        %v1025 = vadd.f32 %v941, %v1024
        %v1026 = vpop.f32.mrb[0].mxu0
        %v1027 = vpop.f32.mrb[0].mxu0
        %v1028 = vpop.f32.mrb[0].mxu0
        %1029 = vdwg.mxu0
        %v1030 = vmul.f32 %v1025, 0.2
        %v1031 = vmax.f32 %v1025, %v1030
        %s1032 = scalar_lea.vmem %s202, 448 [#allocation5]
        %v1033 = vld [vmem:[%s1032] sm:$0xf]
        %v1034 = vld [vmem:[%s1032 + $0x4] sm:$0xf]
        %v1035 = vld [vmem:[%s1032 + $0x8] sm:$0xf]
        %v1036 = vld [vmem:[%s1032 + $0xc] sm:$0xf]
        %v1037 = vld [vmem:[%s1032 + $0x10] sm:$0xf]
        %v1038 = vld [vmem:[%s1032 + $0x14] sm:$0xf]
        %v1039 = vld [vmem:[%s1032 + $0x18] sm:$0xf]
        %v1040 = vld [vmem:[%s1032 + $0x1c] sm:$0xf]
        %v1041 = vld [vmem:[%s1032 + $0x20] sm:$0xf]
        %v1042 = vld [vmem:[%s1032 + $0x24] sm:$0xf]
        %v1043 = vld [vmem:[%s1032 + $0x28] sm:$0xf]
        %v1044 = vld [vmem:[%s1032 + $0x2c] sm:$0xf]
        %v1045 = vld [vmem:[%s1032 + $0x30] sm:$0xf]
        %v1046 = vld [vmem:[%s1032 + $0x34] sm:$0xf]
        %v1047 = vld [vmem:[%s1032 + $0x38] sm:$0xf]
        %v1048 = vld [vmem:[%s1032 + $0x3c] sm:$0xf]
        %v1049 = vpack.c.bf16 %v1031, %v1031
        %v1050 = vld [vmem:[%s2 + $0x1] sm:$0x1]
        %v1051 = vlaneseq
        %v1052 = vshrl.u32 %v1051, 7
        %v1053 = vsub.s32 0, %v1052
        %v1054 = vrot.slane %v1050, %v1053
        %v1071 = vunpack.c.l.b16 %v1033
        %v1072 = vunpack.c.l.b16 %v1034
        %v1073 = vunpack.c.l.b16 %v1035
        %v1074 = vunpack.c.l.b16 %v1036
        %v1075 = vunpack.c.l.b16 %v1037
        %v1076 = vunpack.c.l.b16 %v1038
        %v1077 = vunpack.c.l.b16 %v1039
        %v1078 = vunpack.c.l.b16 %v1040
        %v1079 = vunpack.c.l.b16 %v1041
        %v1080 = vunpack.c.l.b16 %v1042
        %v1081 = vunpack.c.l.b16 %v1043
        %v1082 = vunpack.c.l.b16 %v1044
        %v1083 = vunpack.c.l.b16 %v1045
        %v1084 = vunpack.c.l.b16 %v1046
        %v1085 = vunpack.c.l.b16 %v1047
        %v1086 = vunpack.c.l.b16 %v1048
        %v1087 = vpack.c.b16 %v1072, %v1071
        %v1088 = vpack.c.b16 %v1074, %v1073
        %v1089 = vpack.c.b16 %v1076, %v1075
        %v1090 = vpack.c.b16 %v1078, %v1077
        %v1091 = vpack.c.b16 %v1080, %v1079
        %v1092 = vpack.c.b16 %v1082, %v1081
        %v1093 = vpack.c.b16 %v1084, %v1083
        %v1094 = vpack.c.b16 %v1086, %v1085
        %1103 = vmatprep.subr.bf16.mxu0 0
        %1104 = vmatpush1.bf16.xpose.msra.mxu0 %v1087
        %1105 = vmatprep.subr.bf16.mxu0 0
        %1106 = vmatpush1.bf16.xpose.msra.mxu0 %v1088
        %1107 = vmatprep.subr.bf16.mxu0 0
        %1108 = vmatpush1.bf16.xpose.msra.mxu0 %v1089
        %1109 = vmatprep.subr.bf16.mxu0 0
        %1110 = vmatpush1.bf16.xpose.msra.mxu0 %v1090
        %1111 = vmatprep.subr.bf16.mxu0 0
        %1112 = vmatpush1.bf16.xpose.msra.mxu0 %v1091
        %1113 = vmatprep.subr.bf16.mxu0 0
        %1114 = vmatpush1.bf16.xpose.msra.mxu0 %v1092
        %1115 = vmatprep.subr.bf16.mxu0 0
        %1116 = vmatpush1.bf16.xpose.msra.mxu0 %v1093
        %1117 = vmatprep.subr.bf16.mxu0 0
        %1118 = vmatpush1.bf16.xpose.msra.mxu0 %v1094
        %1119 = vmatprep.subr.bf16.mxu0 0
        %1120 = vmatpush1.bf16.xpose.msra.mxu0 0
        %1121 = vmatprep.subr.bf16.mxu0 0
        %1122 = vmatpush1.bf16.xpose.msra.mxu0 0
        %1123 = vmatprep.subr.bf16.mxu0 0
        %1124 = vmatpush1.bf16.xpose.msra.mxu0 0
        %1125 = vmatprep.subr.bf16.mxu0 0
        %1126 = vmatpush1.bf16.xpose.msra.mxu0 0
        %1127 = vmatprep.subr.bf16.mxu0 0
        %1128 = vmatpush1.bf16.xpose.msra.mxu0 0
        %1129 = vmatprep.subr.bf16.mxu0 0
        %1130 = vmatpush1.bf16.xpose.msra.mxu0 0
        %1131 = vmatprep.subr.bf16.mxu0 0
        %1132 = vmatpush1.bf16.xpose.msra.mxu0 0
        %1133 = vmatprep.subr.bf16.mxu0 0
        %1134 = vmatpush1.bf16.xpose.msra.mxu0 0
        %1135 = vmatprep.mubr.bf16.mxu0 0
        %1136 = vmatmul.mubr.bf16.gmra.mrb[0].mxu0 %v1049
        %v1137 = vpop.f32.mrb[0].mxu0
        %v1138 = vadd.f32 %v1054, %v1137
        %v1139 = vpop.f32.mrb[0].mxu0
        %v1140 = vpop.f32.mrb[0].mxu0
        %v1141 = vpop.f32.mrb[0].mxu0
        %1142 = vdwg.mxu0
        %v1143 = vmul.f32 %v1138, 0.2
        %v1144 = vmax.f32 %v1138, %v1143
        %s1145 = scalar_lea.vmem %s202, 512 [#allocation5]
        %v1146 = vld [vmem:[%s1145] sm:$0xf]
        %v1147 = vld [vmem:[%s1145 + $0x4] sm:$0xf]
        %v1148 = vld [vmem:[%s1145 + $0x8] sm:$0xf]
        %v1149 = vld [vmem:[%s1145 + $0xc] sm:$0xf]
        %v1150 = vld [vmem:[%s1145 + $0x10] sm:$0xf]
        %v1151 = vld [vmem:[%s1145 + $0x14] sm:$0xf]
        %v1152 = vld [vmem:[%s1145 + $0x18] sm:$0xf]
        %v1153 = vld [vmem:[%s1145 + $0x1c] sm:$0xf]
        %v1154 = vld [vmem:[%s1145 + $0x20] sm:$0xf]
        %v1155 = vld [vmem:[%s1145 + $0x24] sm:$0xf]
        %v1156 = vld [vmem:[%s1145 + $0x28] sm:$0xf]
        %v1157 = vld [vmem:[%s1145 + $0x2c] sm:$0xf]
        %v1158 = vld [vmem:[%s1145 + $0x30] sm:$0xf]
        %v1159 = vld [vmem:[%s1145 + $0x34] sm:$0xf]
        %v1160 = vld [vmem:[%s1145 + $0x38] sm:$0xf]
        %v1161 = vld [vmem:[%s1145 + $0x3c] sm:$0xf]
        %v1162 = vpack.c.bf16 %v1144, %v1144
        %v1163 = vld [vmem:[%s2 + $0x2] sm:$0x1]
        %v1164 = vlaneseq
        %v1165 = vshrl.u32 %v1164, 7
        %v1166 = vsub.s32 0, %v1165
        %v1167 = vrot.slane %v1163, %v1166
        %v1184 = vunpack.c.l.b16 %v1146
        %v1185 = vunpack.c.l.b16 %v1147
        %v1186 = vunpack.c.l.b16 %v1148
        %v1187 = vunpack.c.l.b16 %v1149
        %v1188 = vunpack.c.l.b16 %v1150
        %v1189 = vunpack.c.l.b16 %v1151
        %v1190 = vunpack.c.l.b16 %v1152
        %v1191 = vunpack.c.l.b16 %v1153
        %v1192 = vunpack.c.l.b16 %v1154
        %v1193 = vunpack.c.l.b16 %v1155
        %v1194 = vunpack.c.l.b16 %v1156
        %v1195 = vunpack.c.l.b16 %v1157
        %v1196 = vunpack.c.l.b16 %v1158
        %v1197 = vunpack.c.l.b16 %v1159
        %v1198 = vunpack.c.l.b16 %v1160
        %v1199 = vunpack.c.l.b16 %v1161
        %v1200 = vpack.c.b16 %v1185, %v1184
        %v1201 = vpack.c.b16 %v1187, %v1186
        %v1202 = vpack.c.b16 %v1189, %v1188
        %v1203 = vpack.c.b16 %v1191, %v1190
        %v1204 = vpack.c.b16 %v1193, %v1192
        %v1205 = vpack.c.b16 %v1195, %v1194
        %v1206 = vpack.c.b16 %v1197, %v1196
        %v1207 = vpack.c.b16 %v1199, %v1198
        %1216 = vmatprep.subr.bf16.mxu0 0
        %1217 = vmatpush1.bf16.xpose.msra.mxu0 %v1200
        %1218 = vmatprep.subr.bf16.mxu0 0
        %1219 = vmatpush1.bf16.xpose.msra.mxu0 %v1201
        %1220 = vmatprep.subr.bf16.mxu0 0
        %1221 = vmatpush1.bf16.xpose.msra.mxu0 %v1202
        %1222 = vmatprep.subr.bf16.mxu0 0
        %1223 = vmatpush1.bf16.xpose.msra.mxu0 %v1203
        %1224 = vmatprep.subr.bf16.mxu0 0
        %1225 = vmatpush1.bf16.xpose.msra.mxu0 %v1204
        %1226 = vmatprep.subr.bf16.mxu0 0
        %1227 = vmatpush1.bf16.xpose.msra.mxu0 %v1205
        %1228 = vmatprep.subr.bf16.mxu0 0
        %1229 = vmatpush1.bf16.xpose.msra.mxu0 %v1206
        %1230 = vmatprep.subr.bf16.mxu0 0
        %1231 = vmatpush1.bf16.xpose.msra.mxu0 %v1207
        %1232 = vmatprep.subr.bf16.mxu0 0
        %1233 = vmatpush1.bf16.xpose.msra.mxu0 0
        %1234 = vmatprep.subr.bf16.mxu0 0
        %1235 = vmatpush1.bf16.xpose.msra.mxu0 0
        %1236 = vmatprep.subr.bf16.mxu0 0
        %1237 = vmatpush1.bf16.xpose.msra.mxu0 0
        %1238 = vmatprep.subr.bf16.mxu0 0
        %1239 = vmatpush1.bf16.xpose.msra.mxu0 0
        %1240 = vmatprep.subr.bf16.mxu0 0
        %1241 = vmatpush1.bf16.xpose.msra.mxu0 0
        %1242 = vmatprep.subr.bf16.mxu0 0
        %1243 = vmatpush1.bf16.xpose.msra.mxu0 0
        %1244 = vmatprep.subr.bf16.mxu0 0
        %1245 = vmatpush1.bf16.xpose.msra.mxu0 0
        %1246 = vmatprep.subr.bf16.mxu0 0
        %1247 = vmatpush1.bf16.xpose.msra.mxu0 0
        %1248 = vmatprep.mubr.bf16.mxu0 0
        %1249 = vmatmul.mubr.bf16.gmra.mrb[0].mxu0 %v1162
        %v1250 = vpop.f32.mrb[0].mxu0
        %v1251 = vadd.f32 %v1167, %v1250
        %v1252 = vpop.f32.mrb[0].mxu0
        %v1253 = vpop.f32.mrb[0].mxu0
        %v1254 = vpop.f32.mrb[0].mxu0
        %1255 = vdwg.mxu0
        %v1256 = vmul.f32 %v1251, 0.2
        %v1257 = vmax.f32 %v1251, %v1256
        %s1258 = scalar_lea.vmem %s229, 4 [#allocation7]
        %1259 = vst [vmem:[%s1258] sm:$0x3] %v1257
        %s1260 = sand.u32 %s104, 1
        %s1261 = scalar_lea.sflag [#allocation4], %s1260
        %s1262 = sand.u32 %s104, 1
        %s1263 = smul.addr %s1262, 6
        %s1264 = scalar_lea.vmem [#allocation7], %s1263
        // Predicated region
        $region41: #{tpu_custom_call.1} parent=31 // pred_check
          %p1265 = pneg %p114
        $region42: #{tpu_custom_call.1} parent=31 // pred_check_branch
          %1267 = sbr.rel (%p1265) target = $region44
        $region43: #{tpu_custom_call.1} parent=31 // pred_region
          %s1268 = smul.u32 3, %s23
          %s1270 = ssub.s32 96, 96
          %1271 = vsyncadd %s1261, %s1270
          %s1272 = smul.addr %s1268, 32
          %s1273 = scalar_lea.hbm %s3, %s1272
          %s1274 = sshll.u32 %s1264, 4
          %s1275 = int_to_ptr.vmem [resolvable:$true] %s1274
          %1280 = dma.vmem_to_hbm [thread:$0]  %s1275, 96, %s1273, %s1261, 32, 32, 2
        $region44: #{tpu_custom_call.1} parent=31 // pred_fallthru
          _
      $region32: #{tpu_custom_call.1} parent=5 // pred_fallthru
        _
      %p1281 = scmp.le.s32.totalorder 2, %s18
      // Predicated region
      $region45: #{tpu_custom_call.1} parent=5 // pred_check
        %p1282 = pneg %p1281
      $region46: #{tpu_custom_call.1} parent=5 // pred_check_branch
        %1284 = sbr.rel (%p1282) target = $region48
      $region47: #{tpu_custom_call.1} parent=5 // pred_region
        %s1285 = ssub.s32 %s18, 2
        // Predicated region
        $region49: #{tpu_custom_call.1} parent=47 // pred_check
          %p1286 = pneg %p120
        $region50: #{tpu_custom_call.1} parent=47 // pred_check_branch
          %1288 = sbr.rel (%p1286) target = $region52
        $region51: #{tpu_custom_call.1} parent=47 // pred_region
          %s1289 = sand.u32 %s105, 1
          %s1290 = scalar_lea.sflag [#allocation4], %s1289
          %s1291 = sand.u32 %s105, 1
          %s1292 = smul.addr %s1291, 6
          %s1293 = scalar_lea.vmem [#allocation7], %s1292
          %1294 = dma.done %s1290, 96
        $region52: #{tpu_custom_call.1} parent=47 // pred_fallthru
          _
      $region48: #{tpu_custom_call.1} parent=5 // pred_fallthru
        _
    $region6: #{tpu_custom_call.1} parent=1 // loop_footer
      %s22 = sadd.s32 1, %s18
    $region7: #{tpu_custom_call.1} parent=1 // loop_footer_branch
      %17 = sbr.rel target = $region3
    $region8: #{tpu_custom_call.1} parent=1 // loop_exit
      _
    %1295 = vsyncpa [#allocation3], 1
    %s1296 = scalar_lea.sflag [#allocation3], 1
    %1297 = vsyncpa %s1296, 1
    %1298 = vsyncpa [#allocation6], 1
    %s1299 = scalar_lea.sflag [#allocation6], 1
    %1300 = vsyncpa %s1299, 1
    %1301 = vsyncpa [#allocation4], 1
    %s1302 = scalar_lea.sflag [#allocation4], 1
    %1303 = vsyncpa %s1302, 1

</llo_original>
